<compile_context>
chip_gen: v5e
topology: v5e:2x2
jax: 0.10.0
libtpu: 0.0.40
codegen_flags: <defaults>
</compile_context>

<pallas_src>
import jax
import jax.numpy as jnp
from jax.experimental import pallas as pl
from jax.experimental.pallas import tpu as pltpu


def _additive_attention_kernel(qk_ref, v_ref, bias_ref,
                               wqkT_ref, wvT_ref, wfcT_ref,
                               out_ref, *attn_out_ref):
    cs = qk_ref.shape[0]                       # rows (= BC*S) in this chunk

    # scores = tanh(query @ Wq^T + key @ Wk^T) as ONE fused matmul
    # (query ++ key on the contraction axis, Wq^T / Wk^T stacked), then the
    # additive bias applies the user mask, batch separation and lane padding.
    scores = jnp.tanh(jnp.dot(qk_ref[...], wqkT_ref[...],
                              preferred_element_type=jnp.float32))
    scores = scores + bias_ref[...]            # [CS, CSP]

    # Numerically-stable softmax along the (padded, block-diagonal) key axis.
    # Padded / cross-batch entries sit at ~-1e30 -> exp underflows to exact 0.
    m = jnp.max(scores, axis=-1, keepdims=True)
    e = jnp.exp(scores - m)
    denom = jnp.sum(e, axis=-1, keepdims=True)
    attn = e * pl.reciprocal(denom, approx=False)   # exact: rows sum to 1

    # V = value @ Wv^T (padded lanes stay zero), then ONE block-diagonal
    # matmul for all batches in the chunk: cross-batch attn entries are 0.
    V = jnp.dot(v_ref[...], wvT_ref[...], preferred_element_type=jnp.float32)
    context = jnp.dot(attn[:, :cs], V, preferred_element_type=jnp.float32)

    # fc(context) + residual (v_ref doubles as the residual; pad lanes are 0).
    out = jnp.dot(context, wfcT_ref[...],
                  preferred_element_type=jnp.float32) + v_ref[...]

    out_ref[...] = out.astype(out_ref.dtype)            # [CS, 128] unmasked vst
    if attn_out_ref:
        attn_out_ref[0][...] = attn.astype(attn_out_ref[0].dtype)


def _round_up(n, m):
    return ((n + m - 1) // m) * m


def additive_attention(query, key, value, mask, wq, wk, wv, wfc,
                       *, num_chunks=1, return_attn=True):
    """query/key/value: [B, S, D] f32; mask: [B, S, S] bool (True = masked).
    wq, wk: [S, D]; wv, wfc: [D, D]  (PyTorch nn.Linear [out, in] layout).

    num_chunks: grid steps over the batch.  Keep 1 at small shapes (v5e/v6e
    have a single TensorCore; on v7x only split once per-chunk work clearly
    exceeds the ~0.35us grid-step overhead)."""
    B, S, D = query.shape
    assert B % num_chunks == 0
    BC = B // num_chunks          # batches per grid step
    CS = BC * S                   # fused M dimension per grid step

    LANE = 128
    DP = _round_up(D, LANE)       # padded d_model lane width
    KQP = _round_up(2 * D, LANE)  # padded fused-QK contraction depth
    CSP = _round_up(CS, LANE)     # padded per-chunk key axis (lane-dense attn)

    f32 = jnp.float32
    NEG_MASK = -1e10              # matches torch masked_fill(-1e10)
    NEG_PAD = -1e30               # exp(-1e30 - m) underflows to exactly 0

    # ---- wrapper-side glue (plain XLA, outside the kernel) ----
    qk = jnp.concatenate([query, key], axis=-1).reshape(B * S, 2 * D).astype(f32)
    qk_pad = jnp.pad(qk, ((0, 0), (0, KQP - 2 * D)))
    v_pad = jnp.pad(value.reshape(B * S, D).astype(f32), ((0, 0), (0, DP - D)))

    # Additive bias: user mask on the own-batch block, -1e30 on cross-batch
    # blocks (block-diagonal separation) and on the padded key lanes.
    own = jnp.where(mask, NEG_MASK, 0.0).astype(f32)                    # (B,S,S)
    onehot = (jnp.arange(BC)[None, :] == (jnp.arange(B) % BC)[:, None])  # (B,BC)
    bias = jnp.where(onehot[:, None, :, None], own[:, :, None, :], NEG_PAD)
    bias = bias.reshape(B, S, BC * S)
    bias = jnp.pad(bias, ((0, 0), (0, 0), (0, CSP - BC * S)),
                   constant_values=NEG_PAD)
    bias = bias.reshape(B * S, CSP).astype(f32)

    # Stacked (Wq^T over Wk^T), batch-tiled and zero-padded weights.
    wqkT = jnp.concatenate([wq.T, wk.T], axis=0).astype(f32)            # (2D,S)
    wqkT = jnp.tile(wqkT, (1, BC))                                      # (2D,BC*S)
    wqkT = jnp.pad(wqkT, ((0, KQP - 2 * D), (0, CSP - BC * S)))
    wvT = jnp.pad(wv.T.astype(f32), ((0, DP - D), (0, DP - D)))
    wfcT = jnp.pad(wfc.T.astype(f32), ((0, DP - D), (0, DP - D)))

    out_shapes = [jax.ShapeDtypeStruct((B * S, DP), f32)]
    out_specs = [pl.BlockSpec((CS, DP), lambda c: (c, 0))]
    if return_attn:
        out_shapes.append(jax.ShapeDtypeStruct((B * S, CSP), f32))
        out_specs.append(pl.BlockSpec((CS, CSP), lambda c: (c, 0)))

    grid_spec = pltpu.PrefetchScalarGridSpec(
        num_scalar_prefetch=0,
        grid=(num_chunks,),
        in_specs=[
            pl.BlockSpec((CS, KQP), lambda c: (c, 0)),   # [query ++ key], padded
            pl.BlockSpec((CS, DP), lambda c: (c, 0)),    # value / residual, padded
            pl.BlockSpec((CS, CSP), lambda c: (c, 0)),   # f32 additive bias
            pl.BlockSpec((KQP, CSP), lambda c: (0, 0)),  # W_qk^T (stacked/tiled)
            pl.BlockSpec((DP, DP), lambda c: (0, 0)),    # W_v^T
            pl.BlockSpec((DP, DP), lambda c: (0, 0)),    # fc^T
        ],
        out_specs=out_specs,
    )

    results = pl.pallas_call(
        _additive_attention_kernel,
        out_shape=tuple(out_shapes),
        grid_spec=grid_spec,
        compiler_params=pltpu.CompilerParams(
            dimension_semantics=("parallel",),
            vmem_limit_bytes=32 * 1024 * 1024),
    )(qk_pad, v_pad, bias, wqkT, wvT, wfcT)

    out = results[0][:, :D].reshape(B, S, D)
    if not return_attn:
        return out, None
    # Recover [B, S, S] attention: cross-batch columns are exactly 0, so a
    # sum over the batch-block axis extracts the block diagonal.
    a = results[1].reshape(num_chunks, BC, S, CSP)[..., : BC * S]
    a = a.reshape(num_chunks, BC, S, BC, S).sum(axis=3)
    return out, a.reshape(B, S, S)


def additive_attention_ref(query, key, value, mask, wq, wk, wv, wfc):
    """Pure-JAX reference mirroring the PyTorch forward."""
    Q = query @ wq.T
    K = key @ wk.T
    scores = jnp.tanh(Q + K)
    V = value @ wv.T
    scores = jnp.where(mask, jnp.float32(-1e10), scores)
    attn = jax.nn.softmax(scores, axis=-1)
    context = attn @ V
    return context @ wfc.T + value, attn


if __name__ == "__main__":
    B, S, D = 2, 8, 32            # batch=2, seq_length=8, d_model=32
    key0 = jax.random.PRNGKey(0)
    kq, kk, kv, km, k1, k2, k3, k4 = jax.random.split(key0, 8)

    query = jax.random.normal(kq, (B, S, D), dtype=jnp.float32)
    keyi = jax.random.normal(kk, (B, S, D), dtype=jnp.float32)
    value = jax.random.normal(kv, (B, S, D), dtype=jnp.float32)
    mask = jax.random.bernoulli(km, p=0.25, shape=(B, S, S))

    # Deterministic parameter init (nn.Linear-shaped weights, [out, in]).
    wq = jax.random.normal(k1, (S, D), dtype=jnp.float32) * 0.1
    wk = jax.random.normal(k2, (S, D), dtype=jnp.float32) * 0.1
    wv = jax.random.normal(k3, (D, D), dtype=jnp.float32) * 0.1
    wfc = jax.random.normal(k4, (D, D), dtype=jnp.float32) * 0.1

    out, attn = additive_attention(query, keyi, value, mask, wq, wk, wv, wfc)
    jax.block_until_ready(out)
    jax.block_until_ready(attn)

    out_ref, attn_ref = additive_attention_ref(query, keyi, value, mask,
                                               wq, wk, wv, wfc)
    assert jnp.allclose(attn, attn_ref, atol=1e-3, rtol=1e-3)
    assert jnp.allclose(out, out_ref, atol=1e-3, rtol=1e-3)

    # Attn-free variant (drops the attention writeback entirely).
    out_only, _ = additive_attention(query, keyi, value, mask,
                                     wq, wk, wv, wfc, return_attn=False)
    jax.block_until_ready(out_only)
    assert jnp.allclose(out_only, out_ref, atol=1e-3, rtol=1e-3)

    # Two-chunk variant (v7x-style megacore split) — exercises num_chunks>1
    # now that the int8-mask sublane hazard is gone.
    out2, attn2 = additive_attention(query, keyi, value, mask,
                                     wq, wk, wv, wfc, num_chunks=2)
    jax.block_until_ready(out2)
    assert jnp.allclose(out2, out_ref, atol=1e-3, rtol=1e-3)
    assert jnp.allclose(attn2, attn_ref, atol=1e-3, rtol=1e-3)

    print("KERNEL_OK")
</pallas_src>

<mosaic_0001>
module attributes {stable_mosaic.version = 11 : i64} {
  func.func @_additive_attention_kernel(%arg0: i32, %arg1: memref<16x128xf32, #tpu.memory_space<vmem>>, %arg2: memref<16x128xf32, #tpu.memory_space<vmem>>, %arg3: memref<16x128xf32, #tpu.memory_space<vmem>>, %arg4: memref<128x128xf32, #tpu.memory_space<vmem>>, %arg5: memref<128x128xf32, #tpu.memory_space<vmem>>, %arg6: memref<128x128xf32, #tpu.memory_space<vmem>>, %arg7: memref<16x128xf32, #tpu.memory_space<vmem>>, %arg8: memref<16x128xf32, #tpu.memory_space<vmem>>) attributes {dimension_semantics = [#tpu.dimension_semantics<parallel>], iteration_bounds = array<i64: 1>, scalar_prefetch = 0 : i64, scratch_operands = 0 : i64, tpu.core_type = #tpu.core_type<tc>, window_params = [{transform_indices = @transform_0, window_bounds = array<i64: 16, 128>}, {transform_indices = @transform_1, window_bounds = array<i64: 16, 128>}, {transform_indices = @transform_2, window_bounds = array<i64: 16, 128>}, {pipeline_mode = #tpu.pipeline_mode<synchronous>, transform_indices = @transform_3, window_bounds = array<i64: 128, 128>}, {pipeline_mode = #tpu.pipeline_mode<synchronous>, transform_indices = @transform_4, window_bounds = array<i64: 128, 128>}, {pipeline_mode = #tpu.pipeline_mode<synchronous>, transform_indices = @transform_5, window_bounds = array<i64: 128, 128>}, {transform_indices = @transform_6, window_bounds = array<i64: 16, 128>}, {transform_indices = @transform_7, window_bounds = array<i64: 16, 128>}]} {
    %c0 = arith.constant 0 : index
    %c0_0 = arith.constant 0 : index
    %0 = vector.load %arg1[%c0, %c0_0] : memref<16x128xf32, #tpu.memory_space<vmem>>, vector<16x128xf32>
    %c0_1 = arith.constant 0 : index
    %c0_2 = arith.constant 0 : index
    %1 = vector.load %arg4[%c0_1, %c0_2] : memref<128x128xf32, #tpu.memory_space<vmem>>, vector<128x128xf32>
    %cst = arith.constant dense<0.000000e+00> : vector<16x128xf32>
    %2 = tpu.matmul %0, %1, %cst {dimension_numbers = #tpu.dot_dimension_numbers<[1], [0], [0], [1], [0, 0, 1, 1], [], []>} : vector<16x128xf32>, vector<128x128xf32>, vector<16x128xf32> -> vector<16x128xf32>
    %3 = math.tanh %2 : vector<16x128xf32>
    %c0_3 = arith.constant 0 : index
    %c0_4 = arith.constant 0 : index
    %4 = vector.load %arg3[%c0_3, %c0_4] : memref<16x128xf32, #tpu.memory_space<vmem>>, vector<16x128xf32>
    %5 = arith.addf %3, %4 : vector<16x128xf32>
    %cst_5 = arith.constant dense<0xFF800000> : vector<16xf32>
    %6 = vector.multi_reduction <maximumf>, %5, %cst_5 [1] : vector<16x128xf32> to vector<16xf32>
    %7 = vector.shape_cast %6 : vector<16xf32> to vector<16x1xf32>
    %8 = vector.broadcast %7 : vector<16x1xf32> to vector<16x128xf32>
    %9 = arith.subf %5, %8 : vector<16x128xf32>
    %10 = math.exp %9 : vector<16x128xf32>
    %cst_6 = arith.constant dense<0.000000e+00> : vector<16xf32>
    %11 = vector.multi_reduction <add>, %10, %cst_6 [1] : vector<16x128xf32> to vector<16xf32>
    %12 = vector.shape_cast %11 : vector<16xf32> to vector<16x1xf32>
    %13 = tpu.reciprocal %12 : vector<16x1xf32> -> vector<16x1xf32>
    %14 = vector.broadcast %13 : vector<16x1xf32> to vector<16x128xf32>
    %15 = arith.mulf %10, %14 : vector<16x128xf32>
    %c0_7 = arith.constant 0 : index
    %c0_8 = arith.constant 0 : index
    %16 = vector.load %arg2[%c0_7, %c0_8] : memref<16x128xf32, #tpu.memory_space<vmem>>, vector<16x128xf32>
    %c0_9 = arith.constant 0 : index
    %c0_10 = arith.constant 0 : index
    %17 = vector.load %arg5[%c0_9, %c0_10] : memref<128x128xf32, #tpu.memory_space<vmem>>, vector<128x128xf32>
    %cst_11 = arith.constant dense<0.000000e+00> : vector<16x128xf32>
    %18 = tpu.matmul %16, %17, %cst_11 {dimension_numbers = #tpu.dot_dimension_numbers<[1], [0], [0], [1], [0, 0, 1, 1], [], []>} : vector<16x128xf32>, vector<128x128xf32>, vector<16x128xf32> -> vector<16x128xf32>
    %19 = vector.extract_strided_slice %15 {offsets = [0, 0], sizes = [16, 16], strides = [1, 1]} : vector<16x128xf32> to vector<16x16xf32>
    %cst_12 = arith.constant dense<0.000000e+00> : vector<16x128xf32>
    %20 = tpu.matmul %19, %18, %cst_12 {dimension_numbers = #tpu.dot_dimension_numbers<[1], [0], [0], [1], [0, 0, 1, 1], [], []>} : vector<16x16xf32>, vector<16x128xf32>, vector<16x128xf32> -> vector<16x128xf32>
    %c0_13 = arith.constant 0 : index
    %c0_14 = arith.constant 0 : index
    %21 = vector.load %arg6[%c0_13, %c0_14] : memref<128x128xf32, #tpu.memory_space<vmem>>, vector<128x128xf32>
    %cst_15 = arith.constant dense<0.000000e+00> : vector<16x128xf32>
    %22 = tpu.matmul %20, %21, %cst_15 {dimension_numbers = #tpu.dot_dimension_numbers<[1], [0], [0], [1], [0, 0, 1, 1], [], []>} : vector<16x128xf32>, vector<128x128xf32>, vector<16x128xf32> -> vector<16x128xf32>
    %c0_16 = arith.constant 0 : index
    %c0_17 = arith.constant 0 : index
    %23 = vector.load %arg2[%c0_16, %c0_17] : memref<16x128xf32, #tpu.memory_space<vmem>>, vector<16x128xf32>
    %24 = arith.addf %22, %23 : vector<16x128xf32>
    %c0_18 = arith.constant 0 : index
    %c0_19 = arith.constant 0 : index
    %25 = vector.load %arg7[%c0_18, %c0_19] : memref<16x128xf32, #tpu.memory_space<vmem>>, vector<16x128xf32>
    tpu.vector_store %arg7[%c0_18, %c0_19], %24 {strides = array<i32>} : memref<16x128xf32, #tpu.memory_space<vmem>>, vector<16x128xf32>,
    %c0_20 = arith.constant 0 : index
    %c0_21 = arith.constant 0 : index
    %26 = vector.load %arg8[%c0_20, %c0_21] : memref<16x128xf32, #tpu.memory_space<vmem>>, vector<16x128xf32>
    tpu.vector_store %arg8[%c0_20, %c0_21], %15 {strides = array<i32>} : memref<16x128xf32, #tpu.memory_space<vmem>>, vector<16x128xf32>,
    return
  }
  func.func @transform_0(%arg0: i32) -> (i32, i32) {
    %c0_i32 = arith.constant 0 : i32
    %c0_i32_0 = arith.constant 0 : i32
    return %arg0, %c0_i32 : i32, i32
  }
  func.func @transform_1(%arg0: i32) -> (i32, i32) {
    %c0_i32 = arith.constant 0 : i32
    %c0_i32_0 = arith.constant 0 : i32
    return %arg0, %c0_i32 : i32, i32
  }
  func.func @transform_2(%arg0: i32) -> (i32, i32) {
    %c0_i32 = arith.constant 0 : i32
    %c0_i32_0 = arith.constant 0 : i32
    return %arg0, %c0_i32 : i32, i32
  }
  func.func @transform_3(%arg0: i32) -> (i32, i32) {
    %c0_i32 = arith.constant 0 : i32
    %c0_i32_0 = arith.constant 0 : i32
    %c0_i32_1 = arith.constant 0 : i32
    return %c0_i32, %c0_i32_0 : i32, i32
  }
  func.func @transform_4(%arg0: i32) -> (i32, i32) {
    %c0_i32 = arith.constant 0 : i32
    %c0_i32_0 = arith.constant 0 : i32
    %c0_i32_1 = arith.constant 0 : i32
    return %c0_i32, %c0_i32_0 : i32, i32
  }
  func.func @transform_5(%arg0: i32) -> (i32, i32) {
    %c0_i32 = arith.constant 0 : i32
    %c0_i32_0 = arith.constant 0 : i32
    %c0_i32_1 = arith.constant 0 : i32
    return %c0_i32, %c0_i32_0 : i32, i32
  }
  func.func @transform_6(%arg0: i32) -> (i32, i32) {
    %c0_i32 = arith.constant 0 : i32
    %c0_i32_0 = arith.constant 0 : i32
    return %arg0, %c0_i32 : i32, i32
  }
  func.func @transform_7(%arg0: i32) -> (i32, i32) {
    %c0_i32 = arith.constant 0 : i32
    %c0_i32_0 = arith.constant 0 : i32
    return %arg0, %c0_i32 : i32, i32
  }
}

</mosaic_0001>

<llo_original>
// kernel: tpu_custom_call.1
$region0: #{tpu_custom_call.1}
  #allocation0 [shape = 'u32[]', space=smem, size = 0x4, offset = 0x4, fixed_abs, tag = 'smem constant byte address 0x4 - core index']
  #allocation1 [shape = 'u32[72,128]{1,0:T(1,128)}', space=vmem, size = 0x9000, scoped, tag = 'internal scratch']
  %s0 = inlined_call_operand.hbm [shape: f32[16,128], index: 0, kind: input, shape index: {}]
  %s1 = inlined_call_operand.hbm [shape: f32[16,128], index: 1, kind: input, shape index: {}]
  %s2 = inlined_call_operand.hbm [shape: f32[16,128], index: 2, kind: input, shape index: {}]
  %s3 = inlined_call_operand.hbm [shape: f32[128,128], index: 3, kind: input, shape index: {}]
  %s4 = inlined_call_operand.hbm [shape: f32[128,128], index: 4, kind: input, shape index: {}]
  %s5 = inlined_call_operand.hbm [shape: f32[128,128], index: 5, kind: input, shape index: {}]
  %s6 = inlined_call_operand.hbm [shape: f32[16,128], index: 6, kind: output, shape index: {0}]
  %s7 = inlined_call_operand.hbm [shape: f32[16,128], index: 7, kind: output, shape index: {1}]
  %8 = xla_tuple %s6, %s7
  %s9 = sld [smem:[#allocation0]]
  $region66: #{tpu_custom_call.1} parent=0
    _
  %s11 = ssub.s32 1, %s9
  %s12 = scalar_select 0, %s11, %s9
  $region1: #{tpu_custom_call.1} parent=0
    #allocation2 [shape = 'u8[8192]{0}', space=vmem, size = 0x2000, scoped, tag = 'input window, operand 0, single buffered']
    #allocation3 [shape = 's32[1]{0}', space=sflag, size = 0x4, scoped, tag = 'scoped memory for tpu_custom_call.1']
    #allocation4 [shape = 's32[1]{0}', space=sflag, size = 0x4, scoped, tag = 'scoped memory for tpu_custom_call.1']
    #allocation5 [shape = 'u8[8192]{0}', space=vmem, size = 0x2000, scoped, tag = 'input window, operand 1, single buffered']
    #allocation6 [shape = 's32[1]{0}', space=sflag, size = 0x4, scoped, tag = 'scoped memory for tpu_custom_call.1']
    #allocation7 [shape = 'u8[8192]{0}', space=vmem, size = 0x2000, scoped, tag = 'input window, operand 2, single buffered']
    #allocation8 [shape = 'u8[65536]{0}', space=vmem, size = 0x10000, scoped, tag = 'input window, operand 3, single buffered']
    #allocation9 [shape = 's32[1]{0}', space=sflag, size = 0x4, scoped, tag = 'scoped memory for tpu_custom_call.1']
    #allocation10 [shape = 'u8[65536]{0}', space=vmem, size = 0x10000, scoped, tag = 'input window, operand 4, single buffered']
    #allocation11 [shape = 'u8[65536]{0}', space=vmem, size = 0x10000, scoped, tag = 'input window, operand 5, single buffered']
    #allocation12 [shape = 's32[1]{0}', space=sflag, size = 0x4, scoped, tag = 'scoped memory for tpu_custom_call.1']
    #allocation13 [shape = 'u8[8192]{0}', space=vmem, size = 0x2000, scoped, tag = 'output window, operand 0, single buffered']
    #allocation14 [shape = 'u8[8192]{0}', space=vmem, size = 0x2000, scoped, tag = 'output window, operand 1, single buffered']
    #allocation15 [shape = 's32[1]{0}', space=sflag, size = 0x4, scoped, tag = 'scoped memory for tpu_custom_call.1']
    %13 = vsyncpa [#allocation3], 0
    %14 = vsyncpa [#allocation6], 0
    %15 = vsyncpa [#allocation9], 0
    %16 = vsyncpa [#allocation12], 0
    %17 = vsyncpa [#allocation4], 0
    %18 = vsyncpa [#allocation15], 0
    // Predicated region
    $region2: #{tpu_custom_call.1} parent=1 // pred_check
      _
    $region3: #{tpu_custom_call.1} parent=1 // pred_check_branch
      %20 = sbr.rel (0) target = $region5
    $region4: #{tpu_custom_call.1} parent=1 // pred_region
      %22 = vsyncadd [#allocation3], 0
      %s23 = sshll.u32 %s0, 4
      %s24 = int_to_ptr.hbm [resolvable:$true] %s23
      %s25 = sshll.u32 [#allocation2], 4
      %s26 = int_to_ptr.vmem [resolvable:$true] %s25
      %31 = dma.hbm_to_vmem [thread:$0]  %s24, 256, %s26, [#allocation3], 128, 128, 8
    $region5: #{tpu_custom_call.1} parent=1 // pred_fallthru
      _
    // Predicated region
    $region6: #{tpu_custom_call.1} parent=1 // pred_check
      _
    $region7: #{tpu_custom_call.1} parent=1 // pred_check_branch
      %33 = sbr.rel (0) target = $region9
    $region8: #{tpu_custom_call.1} parent=1 // pred_region
      %35 = vsyncadd [#allocation6], 0
      %s36 = sshll.u32 %s1, 4
      %s37 = int_to_ptr.hbm [resolvable:$true] %s36
      %s38 = sshll.u32 [#allocation5], 4
      %s39 = int_to_ptr.vmem [resolvable:$true] %s38
      %44 = dma.hbm_to_vmem [thread:$0]  %s37, 256, %s39, [#allocation6], 128, 128, 8
    $region9: #{tpu_custom_call.1} parent=1 // pred_fallthru
      _
    // Predicated region
    $region10: #{tpu_custom_call.1} parent=1 // pred_check
      _
    $region11: #{tpu_custom_call.1} parent=1 // pred_check_branch
      %46 = sbr.rel (0) target = $region13
    $region12: #{tpu_custom_call.1} parent=1 // pred_region
      %48 = vsyncadd [#allocation6], 0
      %s49 = sshll.u32 %s2, 4
      %s50 = int_to_ptr.hbm [resolvable:$true] %s49
      %s51 = sshll.u32 [#allocation7], 4
      %s52 = int_to_ptr.vmem [resolvable:$true] %s51
      %57 = dma.hbm_to_vmem [thread:$0]  %s50, 256, %s52, [#allocation6], 128, 128, 8
    $region13: #{tpu_custom_call.1} parent=1 // pred_fallthru
      _
    // Predicated region
    $region14: #{tpu_custom_call.1} parent=1 // pred_check
      _
    $region15: #{tpu_custom_call.1} parent=1 // pred_check_branch
      %59 = sbr.rel (0) target = $region17
    $region16: #{tpu_custom_call.1} parent=1 // pred_region
      %61 = vsyncadd [#allocation9], 0
      %s62 = sshll.u32 %s3, 4
      %s63 = int_to_ptr.hbm [resolvable:$true] %s62
      %s64 = sshll.u32 [#allocation8], 4
      %s65 = int_to_ptr.vmem [resolvable:$true] %s64
      %70 = dma.hbm_to_vmem [thread:$0]  %s63, 2048, %s65, [#allocation9], 128, 128, 8
    $region17: #{tpu_custom_call.1} parent=1 // pred_fallthru
      _
    // Predicated region
    $region18: #{tpu_custom_call.1} parent=1 // pred_check
      _
    $region19: #{tpu_custom_call.1} parent=1 // pred_check_branch
      %72 = sbr.rel (0) target = $region21
    $region20: #{tpu_custom_call.1} parent=1 // pred_region
      %74 = vsyncadd [#allocation9], 0
      %s75 = sshll.u32 %s4, 4
      %s76 = int_to_ptr.hbm [resolvable:$true] %s75
      %s77 = sshll.u32 [#allocation10], 4
      %s78 = int_to_ptr.vmem [resolvable:$true] %s77
      %83 = dma.hbm_to_vmem [thread:$0]  %s76, 2048, %s78, [#allocation9], 128, 128, 8
    $region21: #{tpu_custom_call.1} parent=1 // pred_fallthru
      _
    // Predicated region
    $region22: #{tpu_custom_call.1} parent=1 // pred_check
      _
    $region23: #{tpu_custom_call.1} parent=1 // pred_check_branch
      %85 = sbr.rel (0) target = $region25
    $region24: #{tpu_custom_call.1} parent=1 // pred_region
      %87 = vsyncadd [#allocation12], 0
      %s88 = sshll.u32 %s5, 4
      %s89 = int_to_ptr.hbm [resolvable:$true] %s88
      %s90 = sshll.u32 [#allocation11], 4
      %s91 = int_to_ptr.vmem [resolvable:$true] %s90
      %96 = dma.hbm_to_vmem [thread:$0]  %s89, 2048, %s91, [#allocation12], 128, 128, 8
    $region25: #{tpu_custom_call.1} parent=1 // pred_fallthru
      _
    // Predicated region
    $region26: #{tpu_custom_call.1} parent=1 // pred_check
      _
    $region27: #{tpu_custom_call.1} parent=1 // pred_check_branch
      %98 = sbr.rel (0) target = $region29
    $region28: #{tpu_custom_call.1} parent=1 // pred_region
      %100 = dma.done [#allocation3], 256
    $region29: #{tpu_custom_call.1} parent=1 // pred_fallthru
      _
    // Predicated region
    $region30: #{tpu_custom_call.1} parent=1 // pred_check
      _
    $region31: #{tpu_custom_call.1} parent=1 // pred_check_branch
      %102 = sbr.rel (0) target = $region33
    $region32: #{tpu_custom_call.1} parent=1 // pred_region
      %104 = dma.done [#allocation6], 256
    $region33: #{tpu_custom_call.1} parent=1 // pred_fallthru
      _
    // Predicated region
    $region34: #{tpu_custom_call.1} parent=1 // pred_check
      _
    $region35: #{tpu_custom_call.1} parent=1 // pred_check_branch
      %106 = sbr.rel (0) target = $region37
    $region36: #{tpu_custom_call.1} parent=1 // pred_region
      %108 = dma.done [#allocation6], 256
    $region37: #{tpu_custom_call.1} parent=1 // pred_fallthru
      _
    // Predicated region
    $region38: #{tpu_custom_call.1} parent=1 // pred_check
      _
    $region39: #{tpu_custom_call.1} parent=1 // pred_check_branch
      %110 = sbr.rel (0) target = $region41
    $region40: #{tpu_custom_call.1} parent=1 // pred_region
      %112 = dma.done [#allocation9], 2048
    $region41: #{tpu_custom_call.1} parent=1 // pred_fallthru
      _
    // Predicated region
    $region42: #{tpu_custom_call.1} parent=1 // pred_check
      _
    $region43: #{tpu_custom_call.1} parent=1 // pred_check_branch
      %114 = sbr.rel (0) target = $region45
    $region44: #{tpu_custom_call.1} parent=1 // pred_region
      %116 = dma.done [#allocation9], 2048
    $region45: #{tpu_custom_call.1} parent=1 // pred_fallthru
      _
    // Predicated region
    $region46: #{tpu_custom_call.1} parent=1 // pred_check
      _
    $region47: #{tpu_custom_call.1} parent=1 // pred_check_branch
      %118 = sbr.rel (0) target = $region49
    $region48: #{tpu_custom_call.1} parent=1 // pred_region
      %120 = dma.done [#allocation12], 2048
    $region49: #{tpu_custom_call.1} parent=1 // pred_fallthru
      _
    %v121 = vld [vmem:[#allocation2] sm:$0xff]
    %v122 = vld [vmem:[#allocation2 + $0x8] sm:$0xff]
    %v123 = vld [vmem:[#allocation8] sm:$0xff]
    %v124 = vld [vmem:[#allocation8 + $0x8] sm:$0xff]
    %v125 = vld [vmem:[#allocation8 + $0x10] sm:$0xff]
    %v126 = vld [vmem:[#allocation8 + $0x18] sm:$0xff]
    %v127 = vld [vmem:[#allocation8 + $0x20] sm:$0xff]
    %v128 = vld [vmem:[#allocation8 + $0x28] sm:$0xff]
    %v129 = vld [vmem:[#allocation8 + $0x30] sm:$0xff]
    %v130 = vld [vmem:[#allocation8 + $0x38] sm:$0xff]
    %v131 = vld [vmem:[#allocation8 + $0x40] sm:$0xff]
    %v132 = vld [vmem:[#allocation8 + $0x48] sm:$0xff]
    %v133 = vld [vmem:[#allocation8 + $0x50] sm:$0xff]
    %v134 = vld [vmem:[#allocation8 + $0x58] sm:$0xff]
    %v135 = vld [vmem:[#allocation8 + $0x60] sm:$0xff]
    %v136 = vld [vmem:[#allocation8 + $0x68] sm:$0xff]
    %v137 = vld [vmem:[#allocation8 + $0x70] sm:$0xff]
    %v138 = vld [vmem:[#allocation8 + $0x78] sm:$0xff]
    %139 = vmatpush.msra.mxu0 %v138
    %140 = vmatpush.msra.mxu0 %v137
    %141 = vmatpush.msra.mxu0 %v136
    %142 = vmatpush.msra.mxu0 %v135
    %143 = vmatpush.msra.mxu0 %v134
    %144 = vmatpush.msra.mxu0 %v133
    %145 = vmatpush.msra.mxu0 %v132
    %146 = vmatpush.msra.mxu0 %v131
    %147 = vmatpush.msra.mxu0 %v130
    %148 = vmatpush.msra.mxu0 %v129
    %149 = vmatpush.msra.mxu0 %v128
    %150 = vmatpush.msra.mxu0 %v127
    %151 = vmatpush.msra.mxu0 %v126
    %152 = vmatpush.msra.mxu0 %v125
    %153 = vmatpush.msra.mxu0 %v124
    %154 = vmatpush.msra.mxu0 %v123
    %155 = vmatmul.f32.gmra.mxu0 %v121
    %v156 = vpop.f32.mrf.mxu0
    %v157 = vadd.f32 0.0, %v156
    %158 = vmatmul.f32.gmra.mxu0 %v122
    %v159 = vpop.f32.mrf.mxu0
    %v160 = vadd.f32 0.0, %v159
    %161 = vdwg.mxu0
    %v162 = vtanh.pop %v157
    %v163 = vtanh.pop %v160
    %v164 = vld [vmem:[#allocation7] sm:$0xff]
    %v165 = vld [vmem:[#allocation7 + $0x8] sm:$0xff]
    %v166 = vadd.f32 %v162, %v164
    %v167 = vadd.f32 %v163, %v165
    %168 = vmax.xlane.f32.xlu0 %v166
    %v169 = vpop.xlane.xlu0 %168
    %170 = vmax.xlane.f32.xlu0 %v167
    %v171 = vpop.xlane.xlu0 %170
    %v172 = vsub.f32 %v166, %v169
    %v173 = vsub.f32 %v167, %v171
    %v174 = vmul.f32 %v172, 1.442695
    %v175 = vpow.pop %v174
    %v176 = vmul.f32 %v173, 1.442695
    %v177 = vpow.pop %v176
    %178 = vadd.xlane.f32.xlu0 %v175
    %v179 = vpop.xlane.xlu0 %178
    %180 = vadd.xlane.f32.xlu0 %v177
    %v181 = vpop.xlane.xlu0 %180
    %v182 = vrcp.pop %v179
    %v183 = vmul.f32 %v179, %v182
    %v184 = vsub.f32 1.0, %v183
    %v185 = vmul.f32 %v182, %v184
    %v186 = vadd.f32 %v182, %v185
    %vm187 = vweird.f32 %v179
    %vm188 = vweird.f32 %v182
    %vm189 = vmor %vm187, %vm188
    %v190 = vsel %vm189, %v182, %v186
    %v191 = vand.u32 2147483647, %v179
    %vm192 = vcmp.eq.f32.partialorder %v191, 8.507059e+37
    %v193 = vand.u32 %v179, 2147483648
    %v194 = vor.u32 1.1754944e-38, %v193
    %v195 = vsel %vm192, %v194, %v190
    %v196 = vrcp.pop %v181
    %v197 = vmul.f32 %v181, %v196
    %v198 = vsub.f32 1.0, %v197
    %v199 = vmul.f32 %v196, %v198
    %v200 = vadd.f32 %v196, %v199
    %vm201 = vweird.f32 %v181
    %vm202 = vweird.f32 %v196
    %vm203 = vmor %vm201, %vm202
    %v204 = vsel %vm203, %v196, %v200
    %v205 = vand.u32 2147483647, %v181
    %vm206 = vcmp.eq.f32.partialorder %v205, 8.507059e+37
    %v207 = vand.u32 %v181, 2147483648
    %v208 = vor.u32 1.1754944e-38, %v207
    %v209 = vsel %vm206, %v208, %v204
    %v210 = vmul.f32 %v175, %v195
    %v211 = vmul.f32 %v177, %v209
    %v212 = vld [vmem:[#allocation5] sm:$0xff]
    %v213 = vld [vmem:[#allocation5 + $0x8] sm:$0xff]
    %v214 = vld [vmem:[#allocation10] sm:$0xff]
    %v215 = vld [vmem:[#allocation10 + $0x8] sm:$0xff]
    %v216 = vld [vmem:[#allocation10 + $0x10] sm:$0xff]
    %v217 = vld [vmem:[#allocation10 + $0x18] sm:$0xff]
    %v218 = vld [vmem:[#allocation10 + $0x20] sm:$0xff]
    %v219 = vld [vmem:[#allocation10 + $0x28] sm:$0xff]
    %v220 = vld [vmem:[#allocation10 + $0x30] sm:$0xff]
    %v221 = vld [vmem:[#allocation10 + $0x38] sm:$0xff]
    %v222 = vld [vmem:[#allocation10 + $0x40] sm:$0xff]
    %v223 = vld [vmem:[#allocation10 + $0x48] sm:$0xff]
    %v224 = vld [vmem:[#allocation10 + $0x50] sm:$0xff]
    %v225 = vld [vmem:[#allocation10 + $0x58] sm:$0xff]
    %v226 = vld [vmem:[#allocation10 + $0x60] sm:$0xff]
    %v227 = vld [vmem:[#allocation10 + $0x68] sm:$0xff]
    %v228 = vld [vmem:[#allocation10 + $0x70] sm:$0xff]
    %v229 = vld [vmem:[#allocation10 + $0x78] sm:$0xff]
    %230 = vmatpush.msra.mxu0 %v229
    %231 = vmatpush.msra.mxu0 %v228
    %232 = vmatpush.msra.mxu0 %v227
    %233 = vmatpush.msra.mxu0 %v226
    %234 = vmatpush.msra.mxu0 %v225
    %235 = vmatpush.msra.mxu0 %v224
    %236 = vmatpush.msra.mxu0 %v223
    %237 = vmatpush.msra.mxu0 %v222
    %238 = vmatpush.msra.mxu0 %v221
    %239 = vmatpush.msra.mxu0 %v220
    %240 = vmatpush.msra.mxu0 %v219
    %241 = vmatpush.msra.mxu0 %v218
    %242 = vmatpush.msra.mxu0 %v217
    %243 = vmatpush.msra.mxu0 %v216
    %244 = vmatpush.msra.mxu0 %v215
    %245 = vmatpush.msra.mxu0 %v214
    %246 = vmatmul.f32.gmra.mxu0 %v212
    %v247 = vpop.f32.mrf.mxu0
    %v248 = vadd.f32 0.0, %v247
    %249 = vmatmul.f32.gmra.mxu0 %v213
    %v250 = vpop.f32.mrf.mxu0
    %v251 = vadd.f32 0.0, %v250
    %252 = vdwg.mxu0
    %vm253 = vcmask 130048
    %v255 = vsel %vm253, %v210, 0
    %v258 = vsel %vm253, %v211, 0
    %260 = vmatpush.msra.mxu0 0.0
    %261 = vmatpush.msra.mxu0 0.0
    %262 = vmatpush.msra.mxu0 0.0
    %263 = vmatpush.msra.mxu0 0.0
    %264 = vmatpush.msra.mxu0 0.0
    %265 = vmatpush.msra.mxu0 0.0
    %266 = vmatpush.msra.mxu0 0.0
    %267 = vmatpush.msra.mxu0 0.0
    %268 = vmatpush.msra.mxu0 0.0
    %269 = vmatpush.msra.mxu0 0.0
    %270 = vmatpush.msra.mxu0 0.0
    %271 = vmatpush.msra.mxu0 0.0
    %272 = vmatpush.msra.mxu0 0.0
    %273 = vmatpush.msra.mxu0 0.0
    %274 = vmatpush.msra.mxu0 %v251
    %275 = vmatpush.msra.mxu0 %v248
    %276 = vmatmul.f32.gmra.mxu0 %v255
    %v277 = vpop.f32.mrf.mxu0
    %v278 = vadd.f32 0.0, %v277
    %279 = vmatmul.f32.gmra.mxu0 %v258
    %v280 = vpop.f32.mrf.mxu0
    %v281 = vadd.f32 0.0, %v280
    %282 = vdwg.mxu0
    %v283 = vld [vmem:[#allocation11] sm:$0xff]
    %v284 = vld [vmem:[#allocation11 + $0x8] sm:$0xff]
    %v285 = vld [vmem:[#allocation11 + $0x10] sm:$0xff]
    %v286 = vld [vmem:[#allocation11 + $0x18] sm:$0xff]
    %v287 = vld [vmem:[#allocation11 + $0x20] sm:$0xff]
    %v288 = vld [vmem:[#allocation11 + $0x28] sm:$0xff]
    %v289 = vld [vmem:[#allocation11 + $0x30] sm:$0xff]
    %v290 = vld [vmem:[#allocation11 + $0x38] sm:$0xff]
    %v291 = vld [vmem:[#allocation11 + $0x40] sm:$0xff]
    %v292 = vld [vmem:[#allocation11 + $0x48] sm:$0xff]
    %v293 = vld [vmem:[#allocation11 + $0x50] sm:$0xff]
    %v294 = vld [vmem:[#allocation11 + $0x58] sm:$0xff]
    %v295 = vld [vmem:[#allocation11 + $0x60] sm:$0xff]
    %v296 = vld [vmem:[#allocation11 + $0x68] sm:$0xff]
    %v297 = vld [vmem:[#allocation11 + $0x70] sm:$0xff]
    %v298 = vld [vmem:[#allocation11 + $0x78] sm:$0xff]
    %299 = vmatpush.msra.mxu0 %v298
    %300 = vmatpush.msra.mxu0 %v297
    %301 = vmatpush.msra.mxu0 %v296
    %302 = vmatpush.msra.mxu0 %v295
    %303 = vmatpush.msra.mxu0 %v294
    %304 = vmatpush.msra.mxu0 %v293
    %305 = vmatpush.msra.mxu0 %v292
    %306 = vmatpush.msra.mxu0 %v291
    %307 = vmatpush.msra.mxu0 %v290
    %308 = vmatpush.msra.mxu0 %v289
    %309 = vmatpush.msra.mxu0 %v288
    %310 = vmatpush.msra.mxu0 %v287
    %311 = vmatpush.msra.mxu0 %v286
    %312 = vmatpush.msra.mxu0 %v285
    %313 = vmatpush.msra.mxu0 %v284
    %314 = vmatpush.msra.mxu0 %v283
    %315 = vmatmul.f32.gmra.mxu0 %v278
    %v316 = vpop.f32.mrf.mxu0
    %v317 = vadd.f32 %v212, %v316
    %318 = vmatmul.f32.gmra.mxu0 %v281
    %v319 = vpop.f32.mrf.mxu0
    %v320 = vadd.f32 %v213, %v319
    %321 = vdwg.mxu0
    %322 = vst [vmem:[#allocation13] sm:$0xff] %v317
    %323 = vst [vmem:[#allocation13 + $0x8] sm:$0xff] %v320
    %324 = vst [vmem:[#allocation14] sm:$0xff] %v210
    %325 = vst [vmem:[#allocation14 + $0x8] sm:$0xff] %v211
    // Predicated region
    $region50: #{tpu_custom_call.1} parent=1 // pred_check
      _
    $region51: #{tpu_custom_call.1} parent=1 // pred_check_branch
      %327 = sbr.rel (0) target = $region53
    $region52: #{tpu_custom_call.1} parent=1 // pred_region
      %329 = vsyncadd [#allocation4], 0
      %s330 = sshll.u32 [#allocation13], 4
      %s331 = int_to_ptr.vmem [resolvable:$true] %s330
      %s332 = sshll.u32 %s6, 4
      %s333 = int_to_ptr.hbm [resolvable:$true] %s332
      %338 = dma.vmem_to_hbm [thread:$0]  %s331, 256, %s333, [#allocation4], 128, 128, 8
    $region53: #{tpu_custom_call.1} parent=1 // pred_fallthru
      _
    // Predicated region
    $region54: #{tpu_custom_call.1} parent=1 // pred_check
      _
    $region55: #{tpu_custom_call.1} parent=1 // pred_check_branch
      %340 = sbr.rel (0) target = $region57
    $region56: #{tpu_custom_call.1} parent=1 // pred_region
      %342 = vsyncadd [#allocation15], 0
      %s343 = sshll.u32 [#allocation14], 4
      %s344 = int_to_ptr.vmem [resolvable:$true] %s343
      %s345 = sshll.u32 %s7, 4
      %s346 = int_to_ptr.hbm [resolvable:$true] %s345
      %351 = dma.vmem_to_hbm [thread:$0]  %s344, 256, %s346, [#allocation15], 128, 128, 8
    $region57: #{tpu_custom_call.1} parent=1 // pred_fallthru
      _
    // Predicated region
    $region58: #{tpu_custom_call.1} parent=1 // pred_check
      _
    $region59: #{tpu_custom_call.1} parent=1 // pred_check_branch
      %353 = sbr.rel (0) target = $region61
    $region60: #{tpu_custom_call.1} parent=1 // pred_region
      %355 = dma.done [#allocation4], 256
    $region61: #{tpu_custom_call.1} parent=1 // pred_fallthru
      _
    // Predicated region
    $region62: #{tpu_custom_call.1} parent=1 // pred_check
      _
    $region63: #{tpu_custom_call.1} parent=1 // pred_check_branch
      %357 = sbr.rel (0) target = $region65
    $region64: #{tpu_custom_call.1} parent=1 // pred_region
      %359 = dma.done [#allocation15], 256
    $region65: #{tpu_custom_call.1} parent=1 // pred_fallthru
      _
    %360 = vsyncpa [#allocation3], 1
    %361 = vsyncpa [#allocation6], 1
    %362 = vsyncpa [#allocation9], 1
    %363 = vsyncpa [#allocation12], 1
    %364 = vsyncpa [#allocation4], 1
    %365 = vsyncpa [#allocation15], 1

</llo_original>
